<compile_context>
chip_gen: v7x
topology: tpu7x:2x2x1
jax: 0.10.0
libtpu: 0.0.40
codegen_flags: <defaults>
</compile_context>

<pallas_src>
import functools

import jax
import jax.numpy as jnp
from jax.experimental import pallas as pl
from jax.experimental.pallas import tpu as pltpu


_LANES = 128
_MAX_TM = 1024          # rows per tile -> 512 KiB per f32 input block


# --------------------------------------------------------------------------
# In-kernel helpers
# --------------------------------------------------------------------------
def _laplace_nll(p_ref, b_ref, t_ref):
    p = p_ref[...].astype(jnp.float32)
    b = b_ref[...].astype(jnp.float32)
    t = t_ref[...].astype(jnp.float32)
    # NOTE: beta <= 0 produces NaN/Inf exactly like the PyTorch reference.
    return jnp.log(2.0 * b) + jnp.abs(t - p) / b


def _partial_rows(x):
    """(TM, 128) -> (8, 128) partial sum via a pairwise tree of vreg adds."""
    tm = x.shape[0]
    chunks = [x[k * 8:(k + 1) * 8, :] for k in range(tm // 8)]
    while len(chunks) > 1:
        nxt = [chunks[i] + chunks[i + 1] for i in range(0, len(chunks) - 1, 2)]
        if len(chunks) % 2:
            nxt.append(chunks[-1])
        chunks = nxt
    return chunks[0]


# --------------------------------------------------------------------------
# Kernels
# --------------------------------------------------------------------------
def _sum_kernel_w(p_ref, b_ref, t_ref, w_ref, out_ref):
    nll = _laplace_nll(p_ref, b_ref, t_ref) * w_ref[...].astype(jnp.float32)
    out_ref[...] = _partial_rows(nll)


def _sum_kernel_nw(p_ref, b_ref, t_ref, out_ref):
    out_ref[...] = _partial_rows(_laplace_nll(p_ref, b_ref, t_ref))


def _elem_kernel_w(p_ref, b_ref, t_ref, w_ref, out_ref, *, scale):
    nll = _laplace_nll(p_ref, b_ref, t_ref) * w_ref[...].astype(jnp.float32)
    out_ref[...] = nll * scale


def _elem_kernel_nw(p_ref, b_ref, t_ref, out_ref, *, scale):
    out_ref[...] = _laplace_nll(p_ref, b_ref, t_ref) * scale


# --------------------------------------------------------------------------
# Wrappers
# --------------------------------------------------------------------------
def _round_up(x, m):
    return (x + m - 1) // m * m


def _plan(size):
    """(total_rows, tile_rows, grid) for a lane-dense (rows, 128) view.

    Tile rows are balanced across the grid so padding waste is at most a few
    rows per grid step (instead of up to a whole max-size tile).
    """
    r0 = pl.cdiv(max(size, 1), _LANES)        # rows needed for the data
    rows8 = _round_up(max(r0, 8), 8)          # at least one (8, 128) tile
    grid = pl.cdiv(rows8, _MAX_TM)
    tm = _round_up(pl.cdiv(rows8, grid), 8)   # balanced tile rows (mult of 8)
    return tm * grid, tm, grid


def _to_lane_dense(x, fill, rows):
    """Flatten x and view it as (rows, 128); pad only if size is not aligned."""
    flat = x.reshape(-1)
    padded = rows * _LANES
    if flat.shape[0] != padded:
        flat = jnp.pad(flat, (0, padded - flat.shape[0]), constant_values=fill)
    return flat.reshape(rows, _LANES)


def _weighted_nll_sum(pred, beta, target, weight=None):
    """sum(weight * laplace_nll(pred, beta, target)) over all elements."""
    size = pred.size
    rows, tm, grid = _plan(size)

    # Fill values make padded elements contribute exactly 0:
    #   log(2*0.5) + |0-0|/0.5 = 0   (and weight pad = 0 for the weighted case)
    p = _to_lane_dense(pred, 0.0, rows)
    b = _to_lane_dense(beta, 0.5, rows)
    t = _to_lane_dense(target, 0.0, rows)

    in_spec = pl.BlockSpec((tm, _LANES), lambda i: (i, 0))
    inputs = [p, b, t]
    in_specs = [in_spec, in_spec, in_spec]
    kernel = _sum_kernel_nw
    if weight is not None:
        inputs.append(_to_lane_dense(weight, 0.0, rows))
        in_specs.append(in_spec)
        kernel = _sum_kernel_w

    partials = pl.pallas_call(
        kernel,
        out_shape=jax.ShapeDtypeStruct((8 * grid, _LANES), jnp.float32),
        grid_spec=pltpu.PrefetchScalarGridSpec(
            num_scalar_prefetch=0,
            grid=(grid,),
            in_specs=in_specs,
            out_specs=pl.BlockSpec((8, _LANES), lambda i: (i, 0)),
        ),
        compiler_params=pltpu.CompilerParams(
            dimension_semantics=("parallel",)),
    )(*inputs)
    # Tiny final cross-lane / cross-tile reduce outside the kernel.
    return jnp.sum(partials)


def _weighted_nll_elem(pred, beta, target, weight, scale):
    """Elementwise weight * laplace_nll * scale, returned in pred's shape."""
    size = pred.size
    rows, tm, grid = _plan(size)

    p = _to_lane_dense(pred, 0.0, rows)
    b = _to_lane_dense(beta, 0.5, rows)
    t = _to_lane_dense(target, 0.0, rows)

    in_spec = pl.BlockSpec((tm, _LANES), lambda i: (i, 0))
    inputs = [p, b, t]
    in_specs = [in_spec, in_spec, in_spec]
    if weight is None:
        kernel = functools.partial(_elem_kernel_nw, scale=float(scale))
    else:
        inputs.append(_to_lane_dense(weight, 0.0, rows))
        in_specs.append(in_spec)
        kernel = functools.partial(_elem_kernel_w, scale=float(scale))

    out = pl.pallas_call(
        kernel,
        out_shape=jax.ShapeDtypeStruct((rows, _LANES), jnp.float32),
        grid_spec=pltpu.PrefetchScalarGridSpec(
            num_scalar_prefetch=0,
            grid=(grid,),
            in_specs=in_specs,
            out_specs=in_spec,
        ),
        compiler_params=pltpu.CompilerParams(
            dimension_semantics=("parallel",)),
    )(*inputs)
    return out.reshape(-1)[:size].reshape(pred.shape)


class PtsNLLLoss:
    """JAX/Pallas port of the PyTorch PtsNLLLoss module (forward only)."""

    def __init__(self, reduction='mean', loss_weight=1.0):
        self.reduction = reduction
        self.loss_weight = loss_weight

    def __call__(self, pred, beta, target, weight=None, avg_factor=None,
                 reduction_override=None):
        assert reduction_override in (None, 'none', 'mean', 'sum')
        reduction = reduction_override if reduction_override else self.reduction

        num_points = pred.shape[-1] // 2
        w2 = None if weight is None else weight.reshape(-1, 40)

        if reduction == 'none':
            scale = self.loss_weight / num_points
            return _weighted_nll_elem(pred, beta, target, w2, scale)

        total = _weighted_nll_sum(pred, beta, target, w2)
        if reduction == 'mean':
            denom = float(pred.size) if avg_factor is None else avg_factor
            total = total / denom
        return (self.loss_weight * total) / num_points


# --------------------------------------------------------------------------
# Pure-JAX reference for sanity checking
# --------------------------------------------------------------------------
def _ref_nll(pred, beta, target, weight=None):
    nll = jnp.log(2.0 * beta) + jnp.abs(target - pred) / beta
    if weight is not None:
        nll = nll * weight.reshape(-1, 40)
    return nll


if __name__ == "__main__":
    key = jax.random.PRNGKey(0)
    k1, k2, k3, k4 = jax.random.split(key, 4)

    N = 30            # number of predicted instances (non-multiple of 8/16 on purpose)
    D = 40            # 20 points x 2 coords  => num_points = 20
    num_points = D // 2

    pred = jax.random.normal(k1, (N, D), dtype=jnp.float32)
    beta = jax.nn.softplus(jax.random.normal(k2, (N, D), dtype=jnp.float32)) + 0.1
    target = jax.random.normal(k3, (N, D), dtype=jnp.float32)
    # weight arrives as (N, 20, 2) in the detector and is reshaped to (-1, 40)
    weight = (jax.random.uniform(k4, (N, 20, 2), dtype=jnp.float32) > 0.3
              ).astype(jnp.float32)

    loss_mod = PtsNLLLoss(reduction='mean', loss_weight=1.0)

    # --- reduction='mean', weighted --------------------------------------
    loss = jax.block_until_ready(loss_mod(pred, beta, target, weight=weight))
    ref = _ref_nll(pred, beta, target, weight).mean() / num_points
    assert jnp.allclose(loss, ref, rtol=1e-5, atol=1e-6), (loss, ref)

    # --- reduction='sum', no weight ---------------------------------------
    loss_sum = jax.block_until_ready(
        loss_mod(pred, beta, target, weight=None, reduction_override='sum'))
    ref_sum = _ref_nll(pred, beta, target).sum() / num_points
    assert jnp.allclose(loss_sum, ref_sum, rtol=1e-5, atol=1e-4), (loss_sum, ref_sum)

    # --- reduction='mean' with avg_factor, weighted -----------------------
    loss_avg = jax.block_until_ready(
        loss_mod(pred, beta, target, weight=weight, avg_factor=57.0))
    ref_avg = (_ref_nll(pred, beta, target, weight).sum() / 57.0) / num_points
    assert jnp.allclose(loss_avg, ref_avg, rtol=1e-5, atol=1e-5), (loss_avg, ref_avg)

    # --- reduction='none', weighted ---------------------------------------
    loss_none = jax.block_until_ready(
        loss_mod(pred, beta, target, weight=weight, reduction_override='none'))
    ref_none = _ref_nll(pred, beta, target, weight) / num_points
    assert loss_none.shape == pred.shape
    assert jnp.allclose(loss_none, ref_none, rtol=1e-5, atol=1e-6)

    # --- multi-tile / padded path (grid > 1, balanced tile plan) ----------
    N2 = 3300
    kk = jax.random.split(jax.random.PRNGKey(1), 4)
    pred2 = jax.random.normal(kk[0], (N2, D), dtype=jnp.float32)
    beta2 = jax.nn.softplus(jax.random.normal(kk[1], (N2, D), dtype=jnp.float32)) + 0.1
    target2 = jax.random.normal(kk[2], (N2, D), dtype=jnp.float32)
    weight2 = (jax.random.uniform(kk[3], (N2, 20, 2), dtype=jnp.float32) > 0.3
               ).astype(jnp.float32)
    loss2 = jax.block_until_ready(loss_mod(pred2, beta2, target2, weight=weight2))
    ref2 = _ref_nll(pred2, beta2, target2, weight2).mean() / num_points
    assert jnp.allclose(loss2, ref2, rtol=2e-4, atol=1e-5), (loss2, ref2)

    print("KERNEL_OK")
</pallas_src>

<mosaic_0001>
module attributes {stable_mosaic.version = 11 : i64} {
  func.func @_sum_kernel_w(%arg0: i32, %arg1: memref<16x128xf32, #tpu.memory_space<vmem>>, %arg2: memref<16x128xf32, #tpu.memory_space<vmem>>, %arg3: memref<16x128xf32, #tpu.memory_space<vmem>>, %arg4: memref<16x128xf32, #tpu.memory_space<vmem>>, %arg5: memref<8x128xf32, #tpu.memory_space<vmem>>) attributes {dimension_semantics = [#tpu.dimension_semantics<parallel>], iteration_bounds = array<i64: 1>, scalar_prefetch = 0 : i64, scratch_operands = 0 : i64, tpu.core_type = #tpu.core_type<tc>, window_params = [{transform_indices = @transform_0, window_bounds = array<i64: 16, 128>}, {transform_indices = @transform_1, window_bounds = array<i64: 16, 128>}, {transform_indices = @transform_2, window_bounds = array<i64: 16, 128>}, {transform_indices = @transform_3, window_bounds = array<i64: 16, 128>}, {transform_indices = @transform_4, window_bounds = array<i64: 8, 128>}]} {
    %c0 = arith.constant 0 : index
    %c0_0 = arith.constant 0 : index
    %0 = vector.load %arg1[%c0, %c0_0] : memref<16x128xf32, #tpu.memory_space<vmem>>, vector<16x128xf32>
    %c0_1 = arith.constant 0 : index
    %c0_2 = arith.constant 0 : index
    %1 = vector.load %arg2[%c0_1, %c0_2] : memref<16x128xf32, #tpu.memory_space<vmem>>, vector<16x128xf32>
    %c0_3 = arith.constant 0 : index
    %c0_4 = arith.constant 0 : index
    %2 = vector.load %arg3[%c0_3, %c0_4] : memref<16x128xf32, #tpu.memory_space<vmem>>, vector<16x128xf32>
    %cst = arith.constant 2.000000e+00 : f32
    %3 = vector.broadcast %cst : f32 to vector<16x128xf32>
    %4 = arith.mulf %3, %1 : vector<16x128xf32>
    %5 = math.log %4 : vector<16x128xf32>
    %6 = arith.subf %2, %0 : vector<16x128xf32>
    %7 = math.absf %6 : vector<16x128xf32>
    %8 = arith.divf %7, %1 : vector<16x128xf32>
    %9 = arith.addf %5, %8 : vector<16x128xf32>
    %c0_5 = arith.constant 0 : index
    %c0_6 = arith.constant 0 : index
    %10 = vector.load %arg4[%c0_5, %c0_6] : memref<16x128xf32, #tpu.memory_space<vmem>>, vector<16x128xf32>
    %11 = arith.mulf %9, %10 : vector<16x128xf32>
    %12 = vector.extract_strided_slice %11 {offsets = [0, 0], sizes = [8, 128], strides = [1, 1]} : vector<16x128xf32> to vector<8x128xf32>
    %13 = vector.extract_strided_slice %11 {offsets = [8, 0], sizes = [8, 128], strides = [1, 1]} : vector<16x128xf32> to vector<8x128xf32>
    %14 = arith.addf %12, %13 : vector<8x128xf32>
    %c0_7 = arith.constant 0 : index
    %c0_8 = arith.constant 0 : index
    %15 = vector.load %arg5[%c0_7, %c0_8] : memref<8x128xf32, #tpu.memory_space<vmem>>, vector<8x128xf32>
    tpu.vector_store %arg5[%c0_7, %c0_8], %14 {strides = array<i32>} : memref<8x128xf32, #tpu.memory_space<vmem>>, vector<8x128xf32>,
    return
  }
  func.func @transform_0(%arg0: i32) -> (i32, i32) {
    %c0_i32 = arith.constant 0 : i32
    %c0_i32_0 = arith.constant 0 : i32
    return %arg0, %c0_i32 : i32, i32
  }
  func.func @transform_1(%arg0: i32) -> (i32, i32) {
    %c0_i32 = arith.constant 0 : i32
    %c0_i32_0 = arith.constant 0 : i32
    return %arg0, %c0_i32 : i32, i32
  }
  func.func @transform_2(%arg0: i32) -> (i32, i32) {
    %c0_i32 = arith.constant 0 : i32
    %c0_i32_0 = arith.constant 0 : i32
    return %arg0, %c0_i32 : i32, i32
  }
  func.func @transform_3(%arg0: i32) -> (i32, i32) {
    %c0_i32 = arith.constant 0 : i32
    %c0_i32_0 = arith.constant 0 : i32
    return %arg0, %c0_i32 : i32, i32
  }
  func.func @transform_4(%arg0: i32) -> (i32, i32) {
    %c0_i32 = arith.constant 0 : i32
    %c0_i32_0 = arith.constant 0 : i32
    return %arg0, %c0_i32 : i32, i32
  }
}

</mosaic_0001>

<llo_original>
// kernel: tpu_custom_call.1
$region0: #{tpu_custom_call.1}
  #allocation0 [shape = 'u32[]', space=smem, size = 0x4, offset = 0x4, fixed_abs, tag = 'smem constant byte address 0x4 - core index']
  #allocation1 [shape = 'u32[144,128]{1,0:T(1,128)}', space=vmem, size = 0x12000, scoped, tag = 'internal scratch']
  %s0 = inlined_call_operand.hbm [shape: f32[16,128], index: 0, kind: input, shape index: {}]
  %s1 = inlined_call_operand.hbm [shape: f32[16,128], index: 1, kind: input, shape index: {}]
  %s2 = inlined_call_operand.hbm [shape: f32[16,128], index: 2, kind: input, shape index: {}]
  %s3 = inlined_call_operand.hbm [shape: f32[16,128], index: 3, kind: input, shape index: {}]
  %s4 = inlined_call_operand.hbm [shape: f32[8,128], index: 4, kind: output, shape index: {}]
  %s5 = sld [smem:[#allocation0]]
  $region42: #{tpu_custom_call.1} parent=0
    _
  %s7 = ssub.s32 1, %s5
  %s8 = scalar_select 0, %s7, %s5
  $region1: #{tpu_custom_call.1} parent=0
    #allocation2 [shape = 'u8[8192]{0}', space=vmem, size = 0x2000, scoped, tag = 'input window, operand 0, single buffered']
    #allocation3 [shape = 's32[1]{0}', space=sflag, size = 0x4, scoped, tag = 'scoped memory for tpu_custom_call.1']
    #allocation4 [shape = 's32[1]{0}', space=sflag, size = 0x4, scoped, tag = 'scoped memory for tpu_custom_call.1']
    #allocation5 [shape = 'u8[8192]{0}', space=vmem, size = 0x2000, scoped, tag = 'input window, operand 1, single buffered']
    #allocation6 [shape = 's32[1]{0}', space=sflag, size = 0x4, scoped, tag = 'scoped memory for tpu_custom_call.1']
    #allocation7 [shape = 'u8[8192]{0}', space=vmem, size = 0x2000, scoped, tag = 'input window, operand 2, single buffered']
    #allocation8 [shape = 'u8[8192]{0}', space=vmem, size = 0x2000, scoped, tag = 'input window, operand 3, single buffered']
    #allocation9 [shape = 's32[1]{0}', space=sflag, size = 0x4, scoped, tag = 'scoped memory for tpu_custom_call.1']
    #allocation10 [shape = 'u8[4096]{0}', space=vmem, size = 0x1000, scoped, tag = 'output window, operand 0, single buffered']
    %9 = vsyncpa [#allocation3], 0
    %10 = vsyncpa [#allocation6], 0
    %11 = vsyncpa [#allocation9], 0
    %12 = vsyncpa [#allocation4], 0
    // Predicated region
    $region2: #{tpu_custom_call.1} parent=1 // pred_check
      _
    $region3: #{tpu_custom_call.1} parent=1 // pred_check_branch
      %14 = sbr.rel (0) target = $region5
    $region4: #{tpu_custom_call.1} parent=1 // pred_region
      %s16 = ssub.s32 256, 256
      %17 = vsyncadd [#allocation3], %s16
      %s18 = sshll.u32 [#allocation2], 4
      %s19 = int_to_ptr.vmem [resolvable:$true] %s18
      %24 = dma.hbm_to_vmem [thread:$0]  %s0, 256, %s19, [#allocation3], 128, 128, 8
    $region5: #{tpu_custom_call.1} parent=1 // pred_fallthru
      _
    // Predicated region
    $region6: #{tpu_custom_call.1} parent=1 // pred_check
      _
    $region7: #{tpu_custom_call.1} parent=1 // pred_check_branch
      %26 = sbr.rel (0) target = $region9
    $region8: #{tpu_custom_call.1} parent=1 // pred_region
      %s28 = ssub.s32 256, 256
      %29 = vsyncadd [#allocation6], %s28
      %s30 = sshll.u32 [#allocation5], 4
      %s31 = int_to_ptr.vmem [resolvable:$true] %s30
      %36 = dma.hbm_to_vmem [thread:$0]  %s1, 256, %s31, [#allocation6], 128, 128, 8
    $region9: #{tpu_custom_call.1} parent=1 // pred_fallthru
      _
    // Predicated region
    $region10: #{tpu_custom_call.1} parent=1 // pred_check
      _
    $region11: #{tpu_custom_call.1} parent=1 // pred_check_branch
      %38 = sbr.rel (0) target = $region13
    $region12: #{tpu_custom_call.1} parent=1 // pred_region
      %s40 = ssub.s32 256, 256
      %41 = vsyncadd [#allocation6], %s40
      %s42 = sshll.u32 [#allocation7], 4
      %s43 = int_to_ptr.vmem [resolvable:$true] %s42
      %48 = dma.hbm_to_vmem [thread:$0]  %s2, 256, %s43, [#allocation6], 128, 128, 8
    $region13: #{tpu_custom_call.1} parent=1 // pred_fallthru
      _
    // Predicated region
    $region14: #{tpu_custom_call.1} parent=1 // pred_check
      _
    $region15: #{tpu_custom_call.1} parent=1 // pred_check_branch
      %50 = sbr.rel (0) target = $region17
    $region16: #{tpu_custom_call.1} parent=1 // pred_region
      %s52 = ssub.s32 256, 256
      %53 = vsyncadd [#allocation9], %s52
      %s54 = sshll.u32 [#allocation8], 4
      %s55 = int_to_ptr.vmem [resolvable:$true] %s54
      %60 = dma.hbm_to_vmem [thread:$0]  %s3, 256, %s55, [#allocation9], 128, 128, 8
    $region17: #{tpu_custom_call.1} parent=1 // pred_fallthru
      _
    // Predicated region
    $region18: #{tpu_custom_call.1} parent=1 // pred_check
      _
    $region19: #{tpu_custom_call.1} parent=1 // pred_check_branch
      %62 = sbr.rel (0) target = $region21
    $region20: #{tpu_custom_call.1} parent=1 // pred_region
      %63 = dma.done [#allocation3], 256
    $region21: #{tpu_custom_call.1} parent=1 // pred_fallthru
      _
    // Predicated region
    $region22: #{tpu_custom_call.1} parent=1 // pred_check
      _
    $region23: #{tpu_custom_call.1} parent=1 // pred_check_branch
      %65 = sbr.rel (0) target = $region25
    $region24: #{tpu_custom_call.1} parent=1 // pred_region
      %66 = dma.done [#allocation6], 256
    $region25: #{tpu_custom_call.1} parent=1 // pred_fallthru
      _
    // Predicated region
    $region26: #{tpu_custom_call.1} parent=1 // pred_check
      _
    $region27: #{tpu_custom_call.1} parent=1 // pred_check_branch
      %68 = sbr.rel (0) target = $region29
    $region28: #{tpu_custom_call.1} parent=1 // pred_region
      %69 = dma.done [#allocation6], 256
    $region29: #{tpu_custom_call.1} parent=1 // pred_fallthru
      _
    // Predicated region
    $region30: #{tpu_custom_call.1} parent=1 // pred_check
      _
    $region31: #{tpu_custom_call.1} parent=1 // pred_check_branch
      %71 = sbr.rel (0) target = $region33
    $region32: #{tpu_custom_call.1} parent=1 // pred_region
      %72 = dma.done [#allocation9], 256
    $region33: #{tpu_custom_call.1} parent=1 // pred_fallthru
      _
    %v73 = vld [vmem:[#allocation2] sm:$0xff]
    %v74 = vld [vmem:[#allocation2 + $0x8] sm:$0xff]
    %v75 = vld [vmem:[#allocation5] sm:$0xff]
    %v76 = vld [vmem:[#allocation5 + $0x8] sm:$0xff]
    %v77 = vld [vmem:[#allocation7] sm:$0xff]
    %v78 = vld [vmem:[#allocation7 + $0x8] sm:$0xff]
    %v79 = vmul.f32 %v75, 2.0
    %v80 = vmul.f32 %v76, 2.0
    %v81 = vlog2.pop %v79
    %v82 = vmul.f32 %v81, 0.6931472
    %v83 = vlog2.pop %v80
    %v84 = vmul.f32 %v83, 0.6931472
    %v85 = vsub.f32 %v77, %v73
    %v86 = vsub.f32 %v78, %v74
    %v87 = vand.u32 2147483647, %v85
    %v88 = vand.u32 2147483647, %v86
    %v89 = vrcp.pop %v75
    %v90 = vmul.f32 %v87, %v89
    %v91 = vrcp.pop %v76
    %v92 = vmul.f32 %v88, %v91
    %v93 = vadd.f32 %v82, %v90
    %v94 = vadd.f32 %v84, %v92
    %v95 = vld [vmem:[#allocation8] sm:$0xff]
    %v96 = vld [vmem:[#allocation8 + $0x8] sm:$0xff]
    %v97 = vmul.f32 %v93, %v95
    %v98 = vmul.f32 %v94, %v96
    %v99 = vadd.f32 %v97, %v98
    %100 = vst [vmem:[#allocation10] sm:$0xff] %v99
    // Predicated region
    $region34: #{tpu_custom_call.1} parent=1 // pred_check
      _
    $region35: #{tpu_custom_call.1} parent=1 // pred_check_branch
      %102 = sbr.rel (0) target = $region37
    $region36: #{tpu_custom_call.1} parent=1 // pred_region
      %s104 = ssub.s32 128, 128
      %105 = vsyncadd [#allocation4], %s104
      %s107 = sshll.u32 [#allocation10], 4
      %s108 = int_to_ptr.vmem [resolvable:$true] %s107
      %110 = dma.vmem_to_hbm [thread:$0]  %s108, 128, %s4, [#allocation4]
    $region37: #{tpu_custom_call.1} parent=1 // pred_fallthru
      _
    // Predicated region
    $region38: #{tpu_custom_call.1} parent=1 // pred_check
      _
    $region39: #{tpu_custom_call.1} parent=1 // pred_check_branch
      %112 = sbr.rel (0) target = $region41
    $region40: #{tpu_custom_call.1} parent=1 // pred_region
      %113 = dma.done [#allocation4], 128
    $region41: #{tpu_custom_call.1} parent=1 // pred_fallthru
      _
    %114 = vsyncpa [#allocation3], 1
    %115 = vsyncpa [#allocation6], 1
    %116 = vsyncpa [#allocation9], 1
    %117 = vsyncpa [#allocation4], 1

</llo_original>
